<compile_context>
chip_gen: v6e
topology: v6e:2x2x1
jax: 0.10.0
libtpu: 0.0.40
codegen_flags: <defaults>
</compile_context>

<pallas_src>
import functools

import jax
import jax.numpy as jnp
from jax.experimental import pallas as pl
from jax.experimental.pallas import tpu as pltpu

LANE = 128              # lane width of a TPU vreg
ACC_ROWS = 8            # f32 vreg sublanes -> (8, 128) vector accumulator
ROW_ALIGN = 16          # block sublane multiple valid for both f32 and bf16
_MIN_PALLAS_ELEMS = 64 * 1024   # below this, XLA fusion beats kernel launch cost

# Per-generation block-row caps for 4-byte inputs (rows x 128 lanes):
#   v7x: 16384 rows = 8 MiB f32 (3.2 TB/s HBM -> need big blocks to amortize
#        the ~0.35us per-step overhead), v6e: 4 MiB, v5e: 2 MiB.
_BLOCK_ROWS_BY_GEN = {'v7': 16384, 'v6': 8192, 'v5': 4096}
_DEFAULT_BLOCK_ROWS = 8192
_ABS_MAX_BLOCK_ROWS = 16384     # keeps in-kernel f32 temporaries <= 8 MiB/block
_VMEM_LIMIT_CAP = 56 << 20      # <= v7x 64 MiB physical VMEM per TensorCore


def _tpu_generation():
    """Best-effort TPU generation sniff ('v5'|'v6'|'v7'|None)."""
    try:
        kind = jax.devices()[0].device_kind.lower()
    except Exception:
        return None
    if 'v7' in kind or '7x' in kind:
        return 'v7'
    if 'v6' in kind:
        return 'v6'
    if 'v5' in kind:
        return 'v5'
    return None


def _block_rows_cap(itemsize):
    """Dtype- and generation-aware cap on block rows."""
    rows = _BLOCK_ROWS_BY_GEN.get(_tpu_generation(), _DEFAULT_BLOCK_ROWS)
    if itemsize < 4:
        # bf16 halves bytes/row; double rows so each DMA stays large, but cap
        # so the f32 loss temporaries inside the kernel stay <= 8 MiB/block.
        rows *= 2
    return min(rows, _ABS_MAX_BLOCK_ROWS)


def _choose_block_rows(rows, cap):
    """Largest useful block (<= cap rows, multiple of ROW_ALIGN, <= rows)."""
    if rows <= cap:
        if rows % ROW_ALIGN == 0:
            return rows                       # exactly one full block, no mask
        return max(ROW_ALIGN, (rows // ROW_ALIGN) * ROW_ALIGN)
    return cap


def _elementwise_gan_loss(x, gan_mode, target_is_real, for_discriminator,
                          real_label, fake_label):
    """Unreduced GAN loss (matches the torch Unreduced*Loss modules)."""
    x = x.astype(jnp.float32)
    if gan_mode == 'hinge':
        if for_discriminator:
            if target_is_real:
                return -jnp.minimum(x - 1.0, 0.0)
            return -jnp.minimum(-x - 1.0, 0.0)
        # generator hinge loss must aim for real
        assert target_is_real, "The generator's hinge loss must be aiming for real"
        return -x
    if gan_mode == 'original':
        # binary_cross_entropy_with_logits, reduction='none' (torch-stable form)
        t = real_label if target_is_real else fake_label
        return jnp.maximum(x, 0.0) - x * t + jnp.log1p(jnp.exp(-jnp.abs(x)))
    if gan_mode == 'ls':
        t = real_label if target_is_real else fake_label
        return (x - t) * (x - t)
    if gan_mode == 'w':
        return -x if target_is_real else x
    raise ValueError(f'Unexpected gan_mode {gan_mode}')


def _gan_loss_partial_sum_kernel(x_ref, out_ref, *, gan_mode, target_is_real,
                                 for_discriminator, real_label, fake_label,
                                 num_blocks, valid_rows_last):
    """Elementwise GAN loss folded into an (8, 128) vector accumulator."""
    i = pl.program_id(0)          # reduction axis ("arbitrary")

    @pl.when(i == 0)
    def _():
        out_ref[...] = jnp.zeros_like(out_ref)

    block_rows, lane = x_ref.shape
    x = x_ref[...].astype(jnp.float32)
    loss = _elementwise_gan_loss(x, gan_mode, target_is_real,
                                 for_discriminator, real_label, fake_label)

    def accumulate(l):
        # Fold (block_rows, 128) -> (8, 128): pure VPU adds per step, no per-step
        # cross-lane XLU reduction and no serializing scalar accumulator.  The
        # final scalar reduction over 1024 values happens once in the wrapper.
        folded = l.reshape(block_rows // ACC_ROWS, ACC_ROWS, lane).sum(axis=0)
        out_ref[...] += folded

    if valid_rows_last == block_rows:
        accumulate(loss)
    else:
        # Only the last block hangs past the array edge (lanes are always full:
        # the <128-element tail is handled in the wrapper).
        @pl.when(i != num_blocks - 1)
        def _():
            accumulate(loss)

        @pl.when(i == num_blocks - 1)
        def _():
            # Whole-row mask via a single (block_rows, 1) iota.  Keep this a
            # *select* (not a multiply): the out-of-bounds rows hold unspecified
            # VMEM that may have produced inf/nan in `loss` (e.g. exp/log1p in
            # 'original' mode); jnp.where does not propagate them.
            row = jax.lax.broadcasted_iota(jnp.int32, (block_rows, 1), 0)
            accumulate(jnp.where(row < valid_rows_last, loss, 0.0))


def _pallas_loss_sum(x2, *, gan_mode, target_is_real, for_discriminator,
                     real_label, fake_label):
    """Sum of the elementwise GAN loss over a (rows, 128) lane-dense slab."""
    rows, lane = x2.shape
    assert lane == LANE
    itemsize = x2.dtype.itemsize
    block_rows = _choose_block_rows(rows, _block_rows_cap(itemsize))
    num_blocks = pl.cdiv(rows, block_rows)
    valid_rows_last = rows - (num_blocks - 1) * block_rows

    # Generous VMEM budget: double-buffered input block + a handful of f32
    # block-sized temporaries; clamped under v7x's 64 MiB physical VMEM.
    in_bytes = block_rows * LANE * itemsize
    f32_bytes = block_rows * LANE * 4
    vmem_limit = int(min(_VMEM_LIMIT_CAP,
                         max(32 << 20, 2 * in_bytes + 8 * f32_bytes + (8 << 20))))

    kernel = functools.partial(
        _gan_loss_partial_sum_kernel,
        gan_mode=gan_mode,
        target_is_real=target_is_real,
        for_discriminator=for_discriminator,
        real_label=real_label,
        fake_label=fake_label,
        num_blocks=num_blocks,
        valid_rows_last=valid_rows_last,
    )

    partial = pl.pallas_call(
        kernel,
        out_shape=jax.ShapeDtypeStruct((ACC_ROWS, LANE), jnp.float32),
        grid_spec=pltpu.PrefetchScalarGridSpec(
            num_scalar_prefetch=0,
            grid=(num_blocks,),
            in_specs=[pl.BlockSpec((block_rows, LANE), lambda i: (i, 0))],
            out_specs=pl.BlockSpec((ACC_ROWS, LANE), lambda i: (0, 0)),
        ),
        compiler_params=pltpu.CompilerParams(
            dimension_semantics=("arbitrary",),
            vmem_limit_bytes=vmem_limit),
    )(x2)

    return jnp.sum(partial, dtype=jnp.float32)


def _reduced_gan_loss_single(x, *, gan_mode, target_is_real, for_discriminator,
                             real_label, fake_label):
    """ReducedGANLoss for a single prediction tensor -> scalar mean loss."""
    total = int(x.size)

    def ew(v):
        return _elementwise_gan_loss(v, gan_mode, target_is_real,
                                     for_discriminator, real_label, fake_label)

    if total < _MIN_PALLAS_ELEMS:
        # Tiny patch maps: kernel launch overhead dominates; plain XLA wins.
        return jnp.mean(ew(x))

    rows = total // LANE
    main = rows * LANE
    if main == total:
        x2 = jnp.reshape(x, (rows, LANE))    # free, lane-dense reshape
        tail = None
    else:
        # Lane-ragged numel (uncommon for NCHW patch maps): Pallas handles the
        # lane-aligned majority, the <128-element tail is a tiny XLA sum.  No
        # full-tensor jnp.pad copy / extra HBM pass.
        xf = jnp.ravel(x)
        x2 = jnp.reshape(xf[:main], (rows, LANE))
        tail = xf[main:]

    loss_sum = _pallas_loss_sum(
        x2, gan_mode=gan_mode, target_is_real=target_is_real,
        for_discriminator=for_discriminator, real_label=real_label,
        fake_label=fake_label)
    if tail is not None:
        loss_sum = loss_sum + jnp.sum(ew(tail), dtype=jnp.float32)
    return loss_sum / jnp.float32(total)


class GANLossPallas:
    """JAX/Pallas port of GANLoss (apply_oa_loss=False, the default)."""

    def __init__(self, gan_mode, target_real_label=1.0, target_fake_label=0.0,
                 apply_oa_loss=False):
        if gan_mode not in ['original', 'ls', 'hinge', 'w']:
            raise ValueError(f'Unexpected gan_mode {gan_mode}')
        if apply_oa_loss:
            # TODO(synk): ObjectAwareLossReducer path (weights map + interpolate)
            raise NotImplementedError('ObjectAwareLossReducer path not implemented')
        self.gan_mode = gan_mode
        self.real_label = float(target_real_label)
        self.fake_label = float(target_fake_label)

    def __call__(self, input, input_semantics, target_is_real,
                 for_discriminator):
        # input_semantics is unused by the default mean reducer (matches torch).
        single = lambda p: _reduced_gan_loss_single(
            p,
            gan_mode=self.gan_mode,
            target_is_real=target_is_real,
            for_discriminator=for_discriminator,
            real_label=self.real_label,
            fake_label=self.fake_label,
        )
        if isinstance(input, (list, tuple)):
            # MultiScaleDiscriminatorLossWrapper: average of per-scale means.
            loss = jnp.float32(0.0)
            for pred_i in input:
                if isinstance(pred_i, (list, tuple)):
                    pred_i = pred_i[-1]
                loss = loss + single(pred_i)
            return loss / len(input)
        return single(input)


# ------------------------- pure-JAX reference ------------------------------
def _ref_single(x, gan_mode, target_is_real, for_discriminator,
                real_label=1.0, fake_label=0.0):
    x = x.astype(jnp.float32)
    if gan_mode == 'hinge':
        if for_discriminator:
            if target_is_real:
                loss = -jnp.minimum(x - 1.0, 0.0)
            else:
                loss = -jnp.minimum(-x - 1.0, 0.0)
        else:
            loss = -x
    elif gan_mode == 'original':
        t = real_label if target_is_real else fake_label
        loss = jax.nn.softplus(x) - x * t      # == BCE-with-logits (reduction none)
    elif gan_mode == 'ls':
        t = real_label if target_is_real else fake_label
        loss = (x - t) ** 2
    elif gan_mode == 'w':
        loss = -x if target_is_real else x
    return jnp.mean(loss)


if __name__ == "__main__":
    key = jax.random.PRNGKey(0)
    k1, k2, k3, k4, k5, k6 = jax.random.split(key, 6)

    # Patch-prediction maps (NCHW) large enough to take the Pallas kernel path.
    x_big = jax.random.normal(k1, (2, 4, 128, 128), dtype=jnp.float32)      # 131072 (%128==0)
    x_ragged = jax.random.normal(k2, (3, 1, 173, 131), dtype=jnp.float32)   # 67989 (ragged rows + lane tail)
    x_multi = jax.random.normal(k3, (4, 3, 224, 224), dtype=jnp.float32)    # 602112 (larger single block)

    # Small multi-scale discriminator outputs -> plain-XLA path (threshold).
    x_s0 = jax.random.normal(k4, (2, 1, 16, 16), dtype=jnp.float32)
    x_s1 = jax.random.normal(k5, (2, 1, 8, 8), dtype=jnp.float32)

    # One-hot semantics (coco: 182 classes + unknown = 183 channels); unused by
    # the default (mean) reducer but passed through to match the interface.
    labels = jax.random.randint(k6, (2, 16, 16), 0, 183)
    input_semantics = jax.nn.one_hot(labels, 183, axis=1, dtype=jnp.float32)

    cases = [
        ('hinge', True, True),
        ('hinge', False, True),
        ('hinge', True, False),
        ('original', True, True),
        ('original', False, True),
        ('ls', True, True),
        ('ls', False, True),
        ('w', True, True),
        ('w', False, True),
    ]

    def check(out, ref, tag):
        out = jax.block_until_ready(out)
        assert jnp.allclose(out, ref, rtol=1e-4, atol=1e-5), (
            tag, float(out), float(ref))

    for gan_mode, target_is_real, for_discriminator in cases:
        loss_fn = GANLossPallas(gan_mode)

        # single-tensor kernel paths (aligned single block / ragged rows + tail)
        for name, x in (('big', x_big), ('ragged', x_ragged)):
            out = loss_fn(x, input_semantics, target_is_real, for_discriminator)
            ref = _ref_single(x, gan_mode, target_is_real, for_discriminator)
            check(out, ref, (gan_mode, target_is_real, for_discriminator, name))

        # multi-scale list path (nested list like pix2pixHD discriminators)
        out_ms = loss_fn([[x_s0], [x_s1]], input_semantics, target_is_real,
                         for_discriminator)
        ref_ms = 0.5 * (
            _ref_single(x_s0, gan_mode, target_is_real, for_discriminator)
            + _ref_single(x_s1, gan_mode, target_is_real, for_discriminator))
        check(out_ms, ref_ms, (gan_mode, target_is_real, for_discriminator, 'ms'))

    # Larger input (single bigger block).
    for gan_mode, target_is_real, for_discriminator in [('hinge', True, True),
                                                        ('original', False, True),
                                                        ('w', True, True)]:
        loss_fn = GANLossPallas(gan_mode)
        out = loss_fn(x_multi, input_semantics, target_is_real, for_discriminator)
        ref = _ref_single(x_multi, gan_mode, target_is_real, for_discriminator)
        check(out, ref, (gan_mode, target_is_real, for_discriminator, 'multi'))

    # bf16 input path (kernel casts to f32 in VMEM; halves HBM traffic; bf16
    # blocks get 2x rows so the DMA size stays large).
    x_bf16 = x_big.astype(jnp.bfloat16)
    for gan_mode, target_is_real, for_discriminator in [('hinge', True, True),
                                                        ('ls', False, True)]:
        loss_fn = GANLossPallas(gan_mode)
        out = loss_fn(x_bf16, input_semantics, target_is_real, for_discriminator)
        ref = _ref_single(x_bf16, gan_mode, target_is_real, for_discriminator)
        check(out, ref, (gan_mode, target_is_real, for_discriminator, 'bf16'))

    print("KERNEL_OK")
</pallas_src>

<mosaic_0001>
module attributes {stable_mosaic.version = 11 : i64} {
  func.func @_gan_loss_partial_sum_kernel(%arg0: i32, %arg1: memref<1024x128xf32, #tpu.memory_space<vmem>>, %arg2: memref<8x128xf32, #tpu.memory_space<vmem>>) attributes {dimension_semantics = [#tpu.dimension_semantics<arbitrary>], iteration_bounds = array<i64: 1>, scalar_prefetch = 0 : i64, scratch_operands = 0 : i64, tpu.core_type = #tpu.core_type<tc>, window_params = [{transform_indices = @transform_0, window_bounds = array<i64: 1024, 128>}, {pipeline_mode = #tpu.pipeline_mode<synchronous>, transform_indices = @transform_1, window_bounds = array<i64: 8, 128>}]} {
    %c0_i32 = arith.constant 0 : i32
    %0 = arith.cmpi eq, %arg0, %c0_i32 : i32
    %1 = arith.extui %0 : i1 to i32
    %c0_i32_0 = arith.constant 0 : i32
    %2 = arith.cmpi ne, %1, %c0_i32_0 : i32
    scf.if %2 {
      %cst_9 = arith.constant 0.000000e+00 : f32
      %15 = vector.broadcast %cst_9 : f32 to vector<8x128xf32>
      %c0_10 = arith.constant 0 : index
      %c0_11 = arith.constant 0 : index
      %16 = vector.load %arg2[%c0_10, %c0_11] : memref<8x128xf32, #tpu.memory_space<vmem>>, vector<8x128xf32>
      tpu.vector_store %arg2[%c0_10, %c0_11], %15 {strides = array<i32>} : memref<8x128xf32, #tpu.memory_space<vmem>>, vector<8x128xf32>,
    } else {
    }
    %c0 = arith.constant 0 : index
    %c0_1 = arith.constant 0 : index
    %3 = vector.load %arg1[%c0, %c0_1] : memref<1024x128xf32, #tpu.memory_space<vmem>>, vector<1024x128xf32>
    %cst = arith.constant 1.000000e+00 : f32
    %4 = vector.broadcast %cst : f32 to vector<1024x128xf32>
    %5 = arith.subf %3, %4 : vector<1024x128xf32>
    %cst_2 = arith.constant 0.000000e+00 : f32
    %6 = vector.broadcast %cst_2 : f32 to vector<1024x128xf32>
    %7 = arith.minimumf %5, %6 : vector<1024x128xf32>
    %cst_3 = arith.constant 0.000000e+00 : f32
    %8 = vector.broadcast %cst_3 : f32 to vector<1024x128xf32>
    %9 = arith.subf %8, %7 : vector<1024x128xf32>
    %10 = vector.shape_cast %9 : vector<1024x128xf32> to vector<128x8x128xf32>
    %cst_4 = arith.constant dense<0.000000e+00> : vector<8x128xf32>
    %11 = vector.multi_reduction <add>, %10, %cst_4 [0] : vector<128x8x128xf32> to vector<8x128xf32>
    %c0_5 = arith.constant 0 : index
    %c0_6 = arith.constant 0 : index
    %12 = vector.load %arg2[%c0_5, %c0_6] : memref<8x128xf32, #tpu.memory_space<vmem>>, vector<8x128xf32>
    %13 = arith.addf %12, %11 : vector<8x128xf32>
    %c0_7 = arith.constant 0 : index
    %c0_8 = arith.constant 0 : index
    %14 = vector.load %arg2[%c0_7, %c0_8] : memref<8x128xf32, #tpu.memory_space<vmem>>, vector<8x128xf32>
    tpu.vector_store %arg2[%c0_7, %c0_8], %13 {strides = array<i32>} : memref<8x128xf32, #tpu.memory_space<vmem>>, vector<8x128xf32>,
    return
  }
  func.func @transform_0(%arg0: i32) -> (i32, i32) {
    %c0_i32 = arith.constant 0 : i32
    %c0_i32_0 = arith.constant 0 : i32
    return %arg0, %c0_i32 : i32, i32
  }
  func.func @transform_1(%arg0: i32) -> (i32, i32) {
    %c0_i32 = arith.constant 0 : i32
    %c0_i32_0 = arith.constant 0 : i32
    %c0_i32_1 = arith.constant 0 : i32
    return %c0_i32, %c0_i32_0 : i32, i32
  }
}

</mosaic_0001>

<llo_original>
// kernel: tpu_custom_call.1
$region0: #{tpu_custom_call.1}
  #allocation0 [shape = 'u32[]', space=smem, size = 0x4, offset = 0x4, fixed_abs, tag = 'smem constant byte address 0x4 - core index']
  #allocation1 [shape = 'u32[144,128]{1,0:T(1,128)}', space=vmem, size = 0x12000, scoped, tag = 'internal scratch']
  %s0 = inlined_call_operand.hbm [shape: f32[1024,128], index: 0, kind: input, shape index: {}]
  %s1 = inlined_call_operand.hbm [shape: f32[8,128], index: 1, kind: output, shape index: {}]
  %s2 = sld [smem:[#allocation0]]
  $region22: #{tpu_custom_call.1} parent=0
    _
  %s4 = ssub.s32 1, %s2
  %s5 = scalar_select 0, %s4, %s2
  $region1: #{tpu_custom_call.1} parent=0
    #allocation2 [shape = 'u8[524288]{0}', space=vmem, size = 0x80000, scoped, tag = 'input window, operand 0, single buffered']
    #allocation3 [shape = 's32[1]{0}', space=sflag, size = 0x4, scoped, tag = 'scoped memory for tpu_custom_call.1']
    #allocation4 [shape = 's32[1]{0}', space=sflag, size = 0x4, scoped, tag = 'scoped memory for tpu_custom_call.1']
    #allocation5 [shape = 'u8[4096]{0}', space=vmem, size = 0x1000, scoped, tag = 'output window, operand 0, single buffered']
    %6 = vsyncpa [#allocation3], 0
    %7 = vsyncpa [#allocation4], 0
    // Predicated region
    $region2: #{tpu_custom_call.1} parent=1 // pred_check
      _
    $region3: #{tpu_custom_call.1} parent=1 // pred_check_branch
      %9 = sbr.rel (0) target = $region5
    $region4: #{tpu_custom_call.1} parent=1 // pred_region
      %s11 = ssub.s32 16384, 16384
      %12 = vsyncadd [#allocation3], %s11
      %s13 = sshll.u32 [#allocation2], 4
      %s14 = int_to_ptr.vmem [resolvable:$true] %s13
      %19 = dma.hbm_to_vmem [thread:$0]  %s0, 16384, %s14, [#allocation3], 128, 128, 8
    $region5: #{tpu_custom_call.1} parent=1 // pred_fallthru
      _
    // Predicated region
    $region6: #{tpu_custom_call.1} parent=1 // pred_check
      _
    $region7: #{tpu_custom_call.1} parent=1 // pred_check_branch
      %21 = sbr.rel (0) target = $region9
    $region8: #{tpu_custom_call.1} parent=1 // pred_region
      %22 = dma.done [#allocation3], 16384
    $region9: #{tpu_custom_call.1} parent=1 // pred_fallthru
      _
    %p23 = scmp.eq.s32.totalorder 0, 0
    // Predicated region
    $region10: #{tpu_custom_call.1} parent=1 // pred_check
      %p24 = pneg %p23
    $region11: #{tpu_custom_call.1} parent=1 // pred_check_branch
      %26 = sbr.rel (%p24) target = $region13
    $region12: #{tpu_custom_call.1} parent=1 // pred_region
      %27 = vst [vmem:[#allocation5] sm:$0xff] 0.0
    $region13: #{tpu_custom_call.1} parent=1 // pred_fallthru
      _
    %v28 = vld [vmem:[#allocation2] sm:$0xff]
    %v29 = vld [vmem:[#allocation2 + $0x8] sm:$0xff]
    %v30 = vld [vmem:[#allocation2 + $0x10] sm:$0xff]
    %v31 = vld [vmem:[#allocation2 + $0x18] sm:$0xff]
    %v32 = vld [vmem:[#allocation2 + $0x20] sm:$0xff]
    %v33 = vld [vmem:[#allocation2 + $0x28] sm:$0xff]
    %v34 = vld [vmem:[#allocation2 + $0x30] sm:$0xff]
    %v35 = vld [vmem:[#allocation2 + $0x38] sm:$0xff]
    %v36 = vld [vmem:[#allocation2 + $0x40] sm:$0xff]
    %v37 = vld [vmem:[#allocation2 + $0x48] sm:$0xff]
    %v38 = vld [vmem:[#allocation2 + $0x50] sm:$0xff]
    %v39 = vld [vmem:[#allocation2 + $0x58] sm:$0xff]
    %v40 = vld [vmem:[#allocation2 + $0x60] sm:$0xff]
    %v41 = vld [vmem:[#allocation2 + $0x68] sm:$0xff]
    %v42 = vld [vmem:[#allocation2 + $0x70] sm:$0xff]
    %v43 = vld [vmem:[#allocation2 + $0x78] sm:$0xff]
    %v44 = vld [vmem:[#allocation2 + $0x80] sm:$0xff]
    %v45 = vld [vmem:[#allocation2 + $0x88] sm:$0xff]
    %v46 = vld [vmem:[#allocation2 + $0x90] sm:$0xff]
    %v47 = vld [vmem:[#allocation2 + $0x98] sm:$0xff]
    %v48 = vld [vmem:[#allocation2 + $0xa0] sm:$0xff]
    %v49 = vld [vmem:[#allocation2 + $0xa8] sm:$0xff]
    %v50 = vld [vmem:[#allocation2 + $0xb0] sm:$0xff]
    %v51 = vld [vmem:[#allocation2 + $0xb8] sm:$0xff]
    %v52 = vld [vmem:[#allocation2 + $0xc0] sm:$0xff]
    %v53 = vld [vmem:[#allocation2 + $0xc8] sm:$0xff]
    %v54 = vld [vmem:[#allocation2 + $0xd0] sm:$0xff]
    %v55 = vld [vmem:[#allocation2 + $0xd8] sm:$0xff]
    %v56 = vld [vmem:[#allocation2 + $0xe0] sm:$0xff]
    %v57 = vld [vmem:[#allocation2 + $0xe8] sm:$0xff]
    %v58 = vld [vmem:[#allocation2 + $0xf0] sm:$0xff]
    %v59 = vld [vmem:[#allocation2 + $0xf8] sm:$0xff]
    %v60 = vld [vmem:[#allocation2 + $0x100] sm:$0xff]
    %v61 = vld [vmem:[#allocation2 + $0x108] sm:$0xff]
    %v62 = vld [vmem:[#allocation2 + $0x110] sm:$0xff]
    %v63 = vld [vmem:[#allocation2 + $0x118] sm:$0xff]
    %v64 = vld [vmem:[#allocation2 + $0x120] sm:$0xff]
    %v65 = vld [vmem:[#allocation2 + $0x128] sm:$0xff]
    %v66 = vld [vmem:[#allocation2 + $0x130] sm:$0xff]
    %v67 = vld [vmem:[#allocation2 + $0x138] sm:$0xff]
    %v68 = vld [vmem:[#allocation2 + $0x140] sm:$0xff]
    %v69 = vld [vmem:[#allocation2 + $0x148] sm:$0xff]
    %v70 = vld [vmem:[#allocation2 + $0x150] sm:$0xff]
    %v71 = vld [vmem:[#allocation2 + $0x158] sm:$0xff]
    %v72 = vld [vmem:[#allocation2 + $0x160] sm:$0xff]
    %v73 = vld [vmem:[#allocation2 + $0x168] sm:$0xff]
    %v74 = vld [vmem:[#allocation2 + $0x170] sm:$0xff]
    %v75 = vld [vmem:[#allocation2 + $0x178] sm:$0xff]
    %v76 = vld [vmem:[#allocation2 + $0x180] sm:$0xff]
    %v77 = vld [vmem:[#allocation2 + $0x188] sm:$0xff]
    %v78 = vld [vmem:[#allocation2 + $0x190] sm:$0xff]
    %v79 = vld [vmem:[#allocation2 + $0x198] sm:$0xff]
    %v80 = vld [vmem:[#allocation2 + $0x1a0] sm:$0xff]
    %v81 = vld [vmem:[#allocation2 + $0x1a8] sm:$0xff]
    %v82 = vld [vmem:[#allocation2 + $0x1b0] sm:$0xff]
    %v83 = vld [vmem:[#allocation2 + $0x1b8] sm:$0xff]
    %v84 = vld [vmem:[#allocation2 + $0x1c0] sm:$0xff]
    %v85 = vld [vmem:[#allocation2 + $0x1c8] sm:$0xff]
    %v86 = vld [vmem:[#allocation2 + $0x1d0] sm:$0xff]
    %v87 = vld [vmem:[#allocation2 + $0x1d8] sm:$0xff]
    %v88 = vld [vmem:[#allocation2 + $0x1e0] sm:$0xff]
    %v89 = vld [vmem:[#allocation2 + $0x1e8] sm:$0xff]
    %v90 = vld [vmem:[#allocation2 + $0x1f0] sm:$0xff]
    %v91 = vld [vmem:[#allocation2 + $0x1f8] sm:$0xff]
    %v92 = vld [vmem:[#allocation2 + $0x200] sm:$0xff]
    %v93 = vld [vmem:[#allocation2 + $0x208] sm:$0xff]
    %v94 = vld [vmem:[#allocation2 + $0x210] sm:$0xff]
    %v95 = vld [vmem:[#allocation2 + $0x218] sm:$0xff]
    %v96 = vld [vmem:[#allocation2 + $0x220] sm:$0xff]
    %v97 = vld [vmem:[#allocation2 + $0x228] sm:$0xff]
    %v98 = vld [vmem:[#allocation2 + $0x230] sm:$0xff]
    %v99 = vld [vmem:[#allocation2 + $0x238] sm:$0xff]
    %v100 = vld [vmem:[#allocation2 + $0x240] sm:$0xff]
    %v101 = vld [vmem:[#allocation2 + $0x248] sm:$0xff]
    %v102 = vld [vmem:[#allocation2 + $0x250] sm:$0xff]
    %v103 = vld [vmem:[#allocation2 + $0x258] sm:$0xff]
    %v104 = vld [vmem:[#allocation2 + $0x260] sm:$0xff]
    %v105 = vld [vmem:[#allocation2 + $0x268] sm:$0xff]
    %v106 = vld [vmem:[#allocation2 + $0x270] sm:$0xff]
    %v107 = vld [vmem:[#allocation2 + $0x278] sm:$0xff]
    %v108 = vld [vmem:[#allocation2 + $0x280] sm:$0xff]
    %v109 = vld [vmem:[#allocation2 + $0x288] sm:$0xff]
    %v110 = vld [vmem:[#allocation2 + $0x290] sm:$0xff]
    %v111 = vld [vmem:[#allocation2 + $0x298] sm:$0xff]
    %v112 = vld [vmem:[#allocation2 + $0x2a0] sm:$0xff]
    %v113 = vld [vmem:[#allocation2 + $0x2a8] sm:$0xff]
    %v114 = vld [vmem:[#allocation2 + $0x2b0] sm:$0xff]
    %v115 = vld [vmem:[#allocation2 + $0x2b8] sm:$0xff]
    %v116 = vld [vmem:[#allocation2 + $0x2c0] sm:$0xff]
    %v117 = vld [vmem:[#allocation2 + $0x2c8] sm:$0xff]
    %v118 = vld [vmem:[#allocation2 + $0x2d0] sm:$0xff]
    %v119 = vld [vmem:[#allocation2 + $0x2d8] sm:$0xff]
    %v120 = vld [vmem:[#allocation2 + $0x2e0] sm:$0xff]
    %v121 = vld [vmem:[#allocation2 + $0x2e8] sm:$0xff]
    %v122 = vld [vmem:[#allocation2 + $0x2f0] sm:$0xff]
    %v123 = vld [vmem:[#allocation2 + $0x2f8] sm:$0xff]
    %v124 = vld [vmem:[#allocation2 + $0x300] sm:$0xff]
    %v125 = vld [vmem:[#allocation2 + $0x308] sm:$0xff]
    %v126 = vld [vmem:[#allocation2 + $0x310] sm:$0xff]
    %v127 = vld [vmem:[#allocation2 + $0x318] sm:$0xff]
    %v128 = vld [vmem:[#allocation2 + $0x320] sm:$0xff]
    %v129 = vld [vmem:[#allocation2 + $0x328] sm:$0xff]
    %v130 = vld [vmem:[#allocation2 + $0x330] sm:$0xff]
    %v131 = vld [vmem:[#allocation2 + $0x338] sm:$0xff]
    %v132 = vld [vmem:[#allocation2 + $0x340] sm:$0xff]
    %v133 = vld [vmem:[#allocation2 + $0x348] sm:$0xff]
    %v134 = vld [vmem:[#allocation2 + $0x350] sm:$0xff]
    %v135 = vld [vmem:[#allocation2 + $0x358] sm:$0xff]
    %v136 = vld [vmem:[#allocation2 + $0x360] sm:$0xff]
    %v137 = vld [vmem:[#allocation2 + $0x368] sm:$0xff]
    %v138 = vld [vmem:[#allocation2 + $0x370] sm:$0xff]
    %v139 = vld [vmem:[#allocation2 + $0x378] sm:$0xff]
    %v140 = vld [vmem:[#allocation2 + $0x380] sm:$0xff]
    %v141 = vld [vmem:[#allocation2 + $0x388] sm:$0xff]
    %v142 = vld [vmem:[#allocation2 + $0x390] sm:$0xff]
    %v143 = vld [vmem:[#allocation2 + $0x398] sm:$0xff]
    %v144 = vld [vmem:[#allocation2 + $0x3a0] sm:$0xff]
    %v145 = vld [vmem:[#allocation2 + $0x3a8] sm:$0xff]
    %v146 = vld [vmem:[#allocation2 + $0x3b0] sm:$0xff]
    %v147 = vld [vmem:[#allocation2 + $0x3b8] sm:$0xff]
    %v148 = vld [vmem:[#allocation2 + $0x3c0] sm:$0xff]
    %v149 = vld [vmem:[#allocation2 + $0x3c8] sm:$0xff]
    %v150 = vld [vmem:[#allocation2 + $0x3d0] sm:$0xff]
    %v151 = vld [vmem:[#allocation2 + $0x3d8] sm:$0xff]
    %v152 = vld [vmem:[#allocation2 + $0x3e0] sm:$0xff]
    %v153 = vld [vmem:[#allocation2 + $0x3e8] sm:$0xff]
    %v154 = vld [vmem:[#allocation2 + $0x3f0] sm:$0xff]
    %v155 = vld [vmem:[#allocation2 + $0x3f8] sm:$0xff]
    %v156 = vsub.f32 %v28, 1.0
    %v157 = vsub.f32 %v29, 1.0
    %v158 = vsub.f32 %v30, 1.0
    %v159 = vsub.f32 %v31, 1.0
    %v160 = vsub.f32 %v32, 1.0
    %v161 = vsub.f32 %v33, 1.0
    %v162 = vsub.f32 %v34, 1.0
    %v163 = vsub.f32 %v35, 1.0
    %v164 = vsub.f32 %v36, 1.0
    %v165 = vsub.f32 %v37, 1.0
    %v166 = vsub.f32 %v38, 1.0
    %v167 = vsub.f32 %v39, 1.0
    %v168 = vsub.f32 %v40, 1.0
    %v169 = vsub.f32 %v41, 1.0
    %v170 = vsub.f32 %v42, 1.0
    %v171 = vsub.f32 %v43, 1.0
    %v172 = vsub.f32 %v44, 1.0
    %v173 = vsub.f32 %v45, 1.0
    %v174 = vsub.f32 %v46, 1.0
    %v175 = vsub.f32 %v47, 1.0
    %v176 = vsub.f32 %v48, 1.0
    %v177 = vsub.f32 %v49, 1.0
    %v178 = vsub.f32 %v50, 1.0
    %v179 = vsub.f32 %v51, 1.0
    %v180 = vsub.f32 %v52, 1.0
    %v181 = vsub.f32 %v53, 1.0
    %v182 = vsub.f32 %v54, 1.0
    %v183 = vsub.f32 %v55, 1.0
    %v184 = vsub.f32 %v56, 1.0
    %v185 = vsub.f32 %v57, 1.0
    %v186 = vsub.f32 %v58, 1.0
    %v187 = vsub.f32 %v59, 1.0
    %v188 = vsub.f32 %v60, 1.0
    %v189 = vsub.f32 %v61, 1.0
    %v190 = vsub.f32 %v62, 1.0
    %v191 = vsub.f32 %v63, 1.0
    %v192 = vsub.f32 %v64, 1.0
    %v193 = vsub.f32 %v65, 1.0
    %v194 = vsub.f32 %v66, 1.0
    %v195 = vsub.f32 %v67, 1.0
    %v196 = vsub.f32 %v68, 1.0
    %v197 = vsub.f32 %v69, 1.0
    %v198 = vsub.f32 %v70, 1.0
    %v199 = vsub.f32 %v71, 1.0
    %v200 = vsub.f32 %v72, 1.0
    %v201 = vsub.f32 %v73, 1.0
    %v202 = vsub.f32 %v74, 1.0
    %v203 = vsub.f32 %v75, 1.0
    %v204 = vsub.f32 %v76, 1.0
    %v205 = vsub.f32 %v77, 1.0
    %v206 = vsub.f32 %v78, 1.0
    %v207 = vsub.f32 %v79, 1.0
    %v208 = vsub.f32 %v80, 1.0
    %v209 = vsub.f32 %v81, 1.0
    %v210 = vsub.f32 %v82, 1.0
    %v211 = vsub.f32 %v83, 1.0
    %v212 = vsub.f32 %v84, 1.0
    %v213 = vsub.f32 %v85, 1.0
    %v214 = vsub.f32 %v86, 1.0
    %v215 = vsub.f32 %v87, 1.0
    %v216 = vsub.f32 %v88, 1.0
    %v217 = vsub.f32 %v89, 1.0
    %v218 = vsub.f32 %v90, 1.0
    %v219 = vsub.f32 %v91, 1.0
    %v220 = vsub.f32 %v92, 1.0
    %v221 = vsub.f32 %v93, 1.0
    %v222 = vsub.f32 %v94, 1.0
    %v223 = vsub.f32 %v95, 1.0
    %v224 = vsub.f32 %v96, 1.0
    %v225 = vsub.f32 %v97, 1.0
    %v226 = vsub.f32 %v98, 1.0
    %v227 = vsub.f32 %v99, 1.0
    %v228 = vsub.f32 %v100, 1.0
    %v229 = vsub.f32 %v101, 1.0
    %v230 = vsub.f32 %v102, 1.0
    %v231 = vsub.f32 %v103, 1.0
    %v232 = vsub.f32 %v104, 1.0
    %v233 = vsub.f32 %v105, 1.0
    %v234 = vsub.f32 %v106, 1.0
    %v235 = vsub.f32 %v107, 1.0
    %v236 = vsub.f32 %v108, 1.0
    %v237 = vsub.f32 %v109, 1.0
    %v238 = vsub.f32 %v110, 1.0
    %v239 = vsub.f32 %v111, 1.0
    %v240 = vsub.f32 %v112, 1.0
    %v241 = vsub.f32 %v113, 1.0
    %v242 = vsub.f32 %v114, 1.0
    %v243 = vsub.f32 %v115, 1.0
    %v244 = vsub.f32 %v116, 1.0
    %v245 = vsub.f32 %v117, 1.0
    %v246 = vsub.f32 %v118, 1.0
    %v247 = vsub.f32 %v119, 1.0
    %v248 = vsub.f32 %v120, 1.0
    %v249 = vsub.f32 %v121, 1.0
    %v250 = vsub.f32 %v122, 1.0
    %v251 = vsub.f32 %v123, 1.0
    %v252 = vsub.f32 %v124, 1.0
    %v253 = vsub.f32 %v125, 1.0
    %v254 = vsub.f32 %v126, 1.0
    %v255 = vsub.f32 %v127, 1.0
    %v256 = vsub.f32 %v128, 1.0
    %v257 = vsub.f32 %v129, 1.0
    %v258 = vsub.f32 %v130, 1.0
    %v259 = vsub.f32 %v131, 1.0
    %v260 = vsub.f32 %v132, 1.0
    %v261 = vsub.f32 %v133, 1.0
    %v262 = vsub.f32 %v134, 1.0
    %v263 = vsub.f32 %v135, 1.0
    %v264 = vsub.f32 %v136, 1.0
    %v265 = vsub.f32 %v137, 1.0
    %v266 = vsub.f32 %v138, 1.0
    %v267 = vsub.f32 %v139, 1.0
    %v268 = vsub.f32 %v140, 1.0
    %v269 = vsub.f32 %v141, 1.0
    %v270 = vsub.f32 %v142, 1.0
    %v271 = vsub.f32 %v143, 1.0
    %v272 = vsub.f32 %v144, 1.0
    %v273 = vsub.f32 %v145, 1.0
    %v274 = vsub.f32 %v146, 1.0
    %v275 = vsub.f32 %v147, 1.0
    %v276 = vsub.f32 %v148, 1.0
    %v277 = vsub.f32 %v149, 1.0
    %v278 = vsub.f32 %v150, 1.0
    %v279 = vsub.f32 %v151, 1.0
    %v280 = vsub.f32 %v152, 1.0
    %v281 = vsub.f32 %v153, 1.0
    %v282 = vsub.f32 %v154, 1.0
    %v283 = vsub.f32 %v155, 1.0
    %v284 = vmin.f32 %v156, 0.0
    %v285 = vmin.f32 %v157, 0.0
    %v286 = vmin.f32 %v158, 0.0
    %v287 = vmin.f32 %v159, 0.0
    %v288 = vmin.f32 %v160, 0.0
    %v289 = vmin.f32 %v161, 0.0
    %v290 = vmin.f32 %v162, 0.0
    %v291 = vmin.f32 %v163, 0.0
    %v292 = vmin.f32 %v164, 0.0
    %v293 = vmin.f32 %v165, 0.0
    %v294 = vmin.f32 %v166, 0.0
    %v295 = vmin.f32 %v167, 0.0
    %v296 = vmin.f32 %v168, 0.0
    %v297 = vmin.f32 %v169, 0.0
    %v298 = vmin.f32 %v170, 0.0
    %v299 = vmin.f32 %v171, 0.0
    %v300 = vmin.f32 %v172, 0.0
    %v301 = vmin.f32 %v173, 0.0
    %v302 = vmin.f32 %v174, 0.0
    %v303 = vmin.f32 %v175, 0.0
    %v304 = vmin.f32 %v176, 0.0
    %v305 = vmin.f32 %v177, 0.0
    %v306 = vmin.f32 %v178, 0.0
    %v307 = vmin.f32 %v179, 0.0
    %v308 = vmin.f32 %v180, 0.0
    %v309 = vmin.f32 %v181, 0.0
    %v310 = vmin.f32 %v182, 0.0
    %v311 = vmin.f32 %v183, 0.0
    %v312 = vmin.f32 %v184, 0.0
    %v313 = vmin.f32 %v185, 0.0
    %v314 = vmin.f32 %v186, 0.0
    %v315 = vmin.f32 %v187, 0.0
    %v316 = vmin.f32 %v188, 0.0
    %v317 = vmin.f32 %v189, 0.0
    %v318 = vmin.f32 %v190, 0.0
    %v319 = vmin.f32 %v191, 0.0
    %v320 = vmin.f32 %v192, 0.0
    %v321 = vmin.f32 %v193, 0.0
    %v322 = vmin.f32 %v194, 0.0
    %v323 = vmin.f32 %v195, 0.0
    %v324 = vmin.f32 %v196, 0.0
    %v325 = vmin.f32 %v197, 0.0
    %v326 = vmin.f32 %v198, 0.0
    %v327 = vmin.f32 %v199, 0.0
    %v328 = vmin.f32 %v200, 0.0
    %v329 = vmin.f32 %v201, 0.0
    %v330 = vmin.f32 %v202, 0.0
    %v331 = vmin.f32 %v203, 0.0
    %v332 = vmin.f32 %v204, 0.0
    %v333 = vmin.f32 %v205, 0.0
    %v334 = vmin.f32 %v206, 0.0
    %v335 = vmin.f32 %v207, 0.0
    %v336 = vmin.f32 %v208, 0.0
    %v337 = vmin.f32 %v209, 0.0
    %v338 = vmin.f32 %v210, 0.0
    %v339 = vmin.f32 %v211, 0.0
    %v340 = vmin.f32 %v212, 0.0
    %v341 = vmin.f32 %v213, 0.0
    %v342 = vmin.f32 %v214, 0.0
    %v343 = vmin.f32 %v215, 0.0
    %v344 = vmin.f32 %v216, 0.0
    %v345 = vmin.f32 %v217, 0.0
    %v346 = vmin.f32 %v218, 0.0
    %v347 = vmin.f32 %v219, 0.0
    %v348 = vmin.f32 %v220, 0.0
    %v349 = vmin.f32 %v221, 0.0
    %v350 = vmin.f32 %v222, 0.0
    %v351 = vmin.f32 %v223, 0.0
    %v352 = vmin.f32 %v224, 0.0
    %v353 = vmin.f32 %v225, 0.0
    %v354 = vmin.f32 %v226, 0.0
    %v355 = vmin.f32 %v227, 0.0
    %v356 = vmin.f32 %v228, 0.0
    %v357 = vmin.f32 %v229, 0.0
    %v358 = vmin.f32 %v230, 0.0
    %v359 = vmin.f32 %v231, 0.0
    %v360 = vmin.f32 %v232, 0.0
    %v361 = vmin.f32 %v233, 0.0
    %v362 = vmin.f32 %v234, 0.0
    %v363 = vmin.f32 %v235, 0.0
    %v364 = vmin.f32 %v236, 0.0
    %v365 = vmin.f32 %v237, 0.0
    %v366 = vmin.f32 %v238, 0.0
    %v367 = vmin.f32 %v239, 0.0
    %v368 = vmin.f32 %v240, 0.0
    %v369 = vmin.f32 %v241, 0.0
    %v370 = vmin.f32 %v242, 0.0
    %v371 = vmin.f32 %v243, 0.0
    %v372 = vmin.f32 %v244, 0.0
    %v373 = vmin.f32 %v245, 0.0
    %v374 = vmin.f32 %v246, 0.0
    %v375 = vmin.f32 %v247, 0.0
    %v376 = vmin.f32 %v248, 0.0
    %v377 = vmin.f32 %v249, 0.0
    %v378 = vmin.f32 %v250, 0.0
    %v379 = vmin.f32 %v251, 0.0
    %v380 = vmin.f32 %v252, 0.0
    %v381 = vmin.f32 %v253, 0.0
    %v382 = vmin.f32 %v254, 0.0
    %v383 = vmin.f32 %v255, 0.0
    %v384 = vmin.f32 %v256, 0.0
    %v385 = vmin.f32 %v257, 0.0
    %v386 = vmin.f32 %v258, 0.0
    %v387 = vmin.f32 %v259, 0.0
    %v388 = vmin.f32 %v260, 0.0
    %v389 = vmin.f32 %v261, 0.0
    %v390 = vmin.f32 %v262, 0.0
    %v391 = vmin.f32 %v263, 0.0
    %v392 = vmin.f32 %v264, 0.0
    %v393 = vmin.f32 %v265, 0.0
    %v394 = vmin.f32 %v266, 0.0
    %v395 = vmin.f32 %v267, 0.0
    %v396 = vmin.f32 %v268, 0.0
    %v397 = vmin.f32 %v269, 0.0
    %v398 = vmin.f32 %v270, 0.0
    %v399 = vmin.f32 %v271, 0.0
    %v400 = vmin.f32 %v272, 0.0
    %v401 = vmin.f32 %v273, 0.0
    %v402 = vmin.f32 %v274, 0.0
    %v403 = vmin.f32 %v275, 0.0
    %v404 = vmin.f32 %v276, 0.0
    %v405 = vmin.f32 %v277, 0.0
    %v406 = vmin.f32 %v278, 0.0
    %v407 = vmin.f32 %v279, 0.0
    %v408 = vmin.f32 %v280, 0.0
    %v409 = vmin.f32 %v281, 0.0
    %v410 = vmin.f32 %v282, 0.0
    %v411 = vmin.f32 %v283, 0.0
    %v412 = vsub.f32 0.0, %v284
    %v413 = vsub.f32 0.0, %v285
    %v414 = vsub.f32 0.0, %v286
    %v415 = vsub.f32 0.0, %v287
    %v416 = vsub.f32 0.0, %v288
    %v417 = vsub.f32 0.0, %v289
    %v418 = vsub.f32 0.0, %v290
    %v419 = vsub.f32 0.0, %v291
    %v420 = vsub.f32 0.0, %v292
    %v421 = vsub.f32 0.0, %v293
    %v422 = vsub.f32 0.0, %v294
    %v423 = vsub.f32 0.0, %v295
    %v424 = vsub.f32 0.0, %v296
    %v425 = vsub.f32 0.0, %v297
    %v426 = vsub.f32 0.0, %v298
    %v427 = vsub.f32 0.0, %v299
    %v428 = vsub.f32 0.0, %v300
    %v429 = vsub.f32 0.0, %v301
    %v430 = vsub.f32 0.0, %v302
    %v431 = vsub.f32 0.0, %v303
    %v432 = vsub.f32 0.0, %v304
    %v433 = vsub.f32 0.0, %v305
    %v434 = vsub.f32 0.0, %v306
    %v435 = vsub.f32 0.0, %v307
    %v436 = vsub.f32 0.0, %v308
    %v437 = vsub.f32 0.0, %v309
    %v438 = vsub.f32 0.0, %v310
    %v439 = vsub.f32 0.0, %v311
    %v440 = vsub.f32 0.0, %v312
    %v441 = vsub.f32 0.0, %v313
    %v442 = vsub.f32 0.0, %v314
    %v443 = vsub.f32 0.0, %v315
    %v444 = vsub.f32 0.0, %v316
    %v445 = vsub.f32 0.0, %v317
    %v446 = vsub.f32 0.0, %v318
    %v447 = vsub.f32 0.0, %v319
    %v448 = vsub.f32 0.0, %v320
    %v449 = vsub.f32 0.0, %v321
    %v450 = vsub.f32 0.0, %v322
    %v451 = vsub.f32 0.0, %v323
    %v452 = vsub.f32 0.0, %v324
    %v453 = vsub.f32 0.0, %v325
    %v454 = vsub.f32 0.0, %v326
    %v455 = vsub.f32 0.0, %v327
    %v456 = vsub.f32 0.0, %v328
    %v457 = vsub.f32 0.0, %v329
    %v458 = vsub.f32 0.0, %v330
    %v459 = vsub.f32 0.0, %v331
    %v460 = vsub.f32 0.0, %v332
    %v461 = vsub.f32 0.0, %v333
    %v462 = vsub.f32 0.0, %v334
    %v463 = vsub.f32 0.0, %v335
    %v464 = vsub.f32 0.0, %v336
    %v465 = vsub.f32 0.0, %v337
    %v466 = vsub.f32 0.0, %v338
    %v467 = vsub.f32 0.0, %v339
    %v468 = vsub.f32 0.0, %v340
    %v469 = vsub.f32 0.0, %v341
    %v470 = vsub.f32 0.0, %v342
    %v471 = vsub.f32 0.0, %v343
    %v472 = vsub.f32 0.0, %v344
    %v473 = vsub.f32 0.0, %v345
    %v474 = vsub.f32 0.0, %v346
    %v475 = vsub.f32 0.0, %v347
    %v476 = vsub.f32 0.0, %v348
    %v477 = vsub.f32 0.0, %v349
    %v478 = vsub.f32 0.0, %v350
    %v479 = vsub.f32 0.0, %v351
    %v480 = vsub.f32 0.0, %v352
    %v481 = vsub.f32 0.0, %v353
    %v482 = vsub.f32 0.0, %v354
    %v483 = vsub.f32 0.0, %v355
    %v484 = vsub.f32 0.0, %v356
    %v485 = vsub.f32 0.0, %v357
    %v486 = vsub.f32 0.0, %v358
    %v487 = vsub.f32 0.0, %v359
    %v488 = vsub.f32 0.0, %v360
    %v489 = vsub.f32 0.0, %v361
    %v490 = vsub.f32 0.0, %v362
    %v491 = vsub.f32 0.0, %v363
    %v492 = vsub.f32 0.0, %v364
    %v493 = vsub.f32 0.0, %v365
    %v494 = vsub.f32 0.0, %v366
    %v495 = vsub.f32 0.0, %v367
    %v496 = vsub.f32 0.0, %v368
    %v497 = vsub.f32 0.0, %v369
    %v498 = vsub.f32 0.0, %v370
    %v499 = vsub.f32 0.0, %v371
    %v500 = vsub.f32 0.0, %v372
    %v501 = vsub.f32 0.0, %v373
    %v502 = vsub.f32 0.0, %v374
    %v503 = vsub.f32 0.0, %v375
    %v504 = vsub.f32 0.0, %v376
    %v505 = vsub.f32 0.0, %v377
    %v506 = vsub.f32 0.0, %v378
    %v507 = vsub.f32 0.0, %v379
    %v508 = vsub.f32 0.0, %v380
    %v509 = vsub.f32 0.0, %v381
    %v510 = vsub.f32 0.0, %v382
    %v511 = vsub.f32 0.0, %v383
    %v512 = vsub.f32 0.0, %v384
    %v513 = vsub.f32 0.0, %v385
    %v514 = vsub.f32 0.0, %v386
    %v515 = vsub.f32 0.0, %v387
    %v516 = vsub.f32 0.0, %v388
    %v517 = vsub.f32 0.0, %v389
    %v518 = vsub.f32 0.0, %v390
    %v519 = vsub.f32 0.0, %v391
    %v520 = vsub.f32 0.0, %v392
    %v521 = vsub.f32 0.0, %v393
    %v522 = vsub.f32 0.0, %v394
    %v523 = vsub.f32 0.0, %v395
    %v524 = vsub.f32 0.0, %v396
    %v525 = vsub.f32 0.0, %v397
    %v526 = vsub.f32 0.0, %v398
    %v527 = vsub.f32 0.0, %v399
    %v528 = vsub.f32 0.0, %v400
    %v529 = vsub.f32 0.0, %v401
    %v530 = vsub.f32 0.0, %v402
    %v531 = vsub.f32 0.0, %v403
    %v532 = vsub.f32 0.0, %v404
    %v533 = vsub.f32 0.0, %v405
    %v534 = vsub.f32 0.0, %v406
    %v535 = vsub.f32 0.0, %v407
    %v536 = vsub.f32 0.0, %v408
    %v537 = vsub.f32 0.0, %v409
    %v538 = vsub.f32 0.0, %v410
    %v539 = vsub.f32 0.0, %v411
    %v540 = vadd.f32 %v412, %v413
    %v541 = vadd.f32 %v540, %v414
    %v542 = vadd.f32 %v541, %v415
    %v543 = vadd.f32 %v542, %v416
    %v544 = vadd.f32 %v543, %v417
    %v545 = vadd.f32 %v544, %v418
    %v546 = vadd.f32 %v545, %v419
    %v547 = vadd.f32 %v546, %v420
    %v548 = vadd.f32 %v547, %v421
    %v549 = vadd.f32 %v548, %v422
    %v550 = vadd.f32 %v549, %v423
    %v551 = vadd.f32 %v550, %v424
    %v552 = vadd.f32 %v551, %v425
    %v553 = vadd.f32 %v552, %v426
    %v554 = vadd.f32 %v553, %v427
    %v555 = vadd.f32 %v554, %v428
    %v556 = vadd.f32 %v555, %v429
    %v557 = vadd.f32 %v556, %v430
    %v558 = vadd.f32 %v557, %v431
    %v559 = vadd.f32 %v558, %v432
    %v560 = vadd.f32 %v559, %v433
    %v561 = vadd.f32 %v560, %v434
    %v562 = vadd.f32 %v561, %v435
    %v563 = vadd.f32 %v562, %v436
    %v564 = vadd.f32 %v563, %v437
    %v565 = vadd.f32 %v564, %v438
    %v566 = vadd.f32 %v565, %v439
    %v567 = vadd.f32 %v566, %v440
    %v568 = vadd.f32 %v567, %v441
    %v569 = vadd.f32 %v568, %v442
    %v570 = vadd.f32 %v569, %v443
    %v571 = vadd.f32 %v570, %v444
    %v572 = vadd.f32 %v571, %v445
    %v573 = vadd.f32 %v572, %v446
    %v574 = vadd.f32 %v573, %v447
    %v575 = vadd.f32 %v574, %v448
    %v576 = vadd.f32 %v575, %v449
    %v577 = vadd.f32 %v576, %v450
    %v578 = vadd.f32 %v577, %v451
    %v579 = vadd.f32 %v578, %v452
    %v580 = vadd.f32 %v579, %v453
    %v581 = vadd.f32 %v580, %v454
    %v582 = vadd.f32 %v581, %v455
    %v583 = vadd.f32 %v582, %v456
    %v584 = vadd.f32 %v583, %v457
    %v585 = vadd.f32 %v584, %v458
    %v586 = vadd.f32 %v585, %v459
    %v587 = vadd.f32 %v586, %v460
    %v588 = vadd.f32 %v587, %v461
    %v589 = vadd.f32 %v588, %v462
    %v590 = vadd.f32 %v589, %v463
    %v591 = vadd.f32 %v590, %v464
    %v592 = vadd.f32 %v591, %v465
    %v593 = vadd.f32 %v592, %v466
    %v594 = vadd.f32 %v593, %v467
    %v595 = vadd.f32 %v594, %v468
    %v596 = vadd.f32 %v595, %v469
    %v597 = vadd.f32 %v596, %v470
    %v598 = vadd.f32 %v597, %v471
    %v599 = vadd.f32 %v598, %v472
    %v600 = vadd.f32 %v599, %v473
    %v601 = vadd.f32 %v600, %v474
    %v602 = vadd.f32 %v601, %v475
    %v603 = vadd.f32 %v602, %v476
    %v604 = vadd.f32 %v603, %v477
    %v605 = vadd.f32 %v604, %v478
    %v606 = vadd.f32 %v605, %v479
    %v607 = vadd.f32 %v606, %v480
    %v608 = vadd.f32 %v607, %v481
    %v609 = vadd.f32 %v608, %v482
    %v610 = vadd.f32 %v609, %v483
    %v611 = vadd.f32 %v610, %v484
    %v612 = vadd.f32 %v611, %v485
    %v613 = vadd.f32 %v612, %v486
    %v614 = vadd.f32 %v613, %v487
    %v615 = vadd.f32 %v614, %v488
    %v616 = vadd.f32 %v615, %v489
    %v617 = vadd.f32 %v616, %v490
    %v618 = vadd.f32 %v617, %v491
    %v619 = vadd.f32 %v618, %v492
    %v620 = vadd.f32 %v619, %v493
    %v621 = vadd.f32 %v620, %v494
    %v622 = vadd.f32 %v621, %v495
    %v623 = vadd.f32 %v622, %v496
    %v624 = vadd.f32 %v623, %v497
    %v625 = vadd.f32 %v624, %v498
    %v626 = vadd.f32 %v625, %v499
    %v627 = vadd.f32 %v626, %v500
    %v628 = vadd.f32 %v627, %v501
    %v629 = vadd.f32 %v628, %v502
    %v630 = vadd.f32 %v629, %v503
    %v631 = vadd.f32 %v630, %v504
    %v632 = vadd.f32 %v631, %v505
    %v633 = vadd.f32 %v632, %v506
    %v634 = vadd.f32 %v633, %v507
    %v635 = vadd.f32 %v634, %v508
    %v636 = vadd.f32 %v635, %v509
    %v637 = vadd.f32 %v636, %v510
    %v638 = vadd.f32 %v637, %v511
    %v639 = vadd.f32 %v638, %v512
    %v640 = vadd.f32 %v639, %v513
    %v641 = vadd.f32 %v640, %v514
    %v642 = vadd.f32 %v641, %v515
    %v643 = vadd.f32 %v642, %v516
    %v644 = vadd.f32 %v643, %v517
    %v645 = vadd.f32 %v644, %v518
    %v646 = vadd.f32 %v645, %v519
    %v647 = vadd.f32 %v646, %v520
    %v648 = vadd.f32 %v647, %v521
    %v649 = vadd.f32 %v648, %v522
    %v650 = vadd.f32 %v649, %v523
    %v651 = vadd.f32 %v650, %v524
    %v652 = vadd.f32 %v651, %v525
    %v653 = vadd.f32 %v652, %v526
    %v654 = vadd.f32 %v653, %v527
    %v655 = vadd.f32 %v654, %v528
    %v656 = vadd.f32 %v655, %v529
    %v657 = vadd.f32 %v656, %v530
    %v658 = vadd.f32 %v657, %v531
    %v659 = vadd.f32 %v658, %v532
    %v660 = vadd.f32 %v659, %v533
    %v661 = vadd.f32 %v660, %v534
    %v662 = vadd.f32 %v661, %v535
    %v663 = vadd.f32 %v662, %v536
    %v664 = vadd.f32 %v663, %v537
    %v665 = vadd.f32 %v664, %v538
    %v666 = vadd.f32 %v665, %v539
    %v667 = vld [vmem:[#allocation5] sm:$0xff]
    %v668 = vadd.f32 %v667, %v666
    %669 = vst [vmem:[#allocation5] sm:$0xff] %v668
    // Predicated region
    $region14: #{tpu_custom_call.1} parent=1 // pred_check
      _
    $region15: #{tpu_custom_call.1} parent=1 // pred_check_branch
      %671 = sbr.rel (0) target = $region17
    $region16: #{tpu_custom_call.1} parent=1 // pred_region
      %s673 = ssub.s32 128, 128
      %674 = vsyncadd [#allocation4], %s673
      %s676 = sshll.u32 [#allocation5], 4
      %s677 = int_to_ptr.vmem [resolvable:$true] %s676
      %679 = dma.vmem_to_hbm [thread:$0]  %s677, 128, %s1, [#allocation4]
    $region17: #{tpu_custom_call.1} parent=1 // pred_fallthru
      _
    // Predicated region
    $region18: #{tpu_custom_call.1} parent=1 // pred_check
      _
    $region19: #{tpu_custom_call.1} parent=1 // pred_check_branch
      %681 = sbr.rel (0) target = $region21
    $region20: #{tpu_custom_call.1} parent=1 // pred_region
      %682 = dma.done [#allocation4], 128
    $region21: #{tpu_custom_call.1} parent=1 // pred_fallthru
      _
    %683 = vsyncpa [#allocation3], 1
    %684 = vsyncpa [#allocation4], 1

</llo_original>
